<compile_context>
chip_gen: v6e
topology: v6e:2x2x1
jax: 0.10.0
libtpu: 0.0.40
codegen_flags: <defaults>
</compile_context>

<pallas_src>
import functools

import jax
import jax.numpy as jnp
from jax.experimental import pallas as pl
from jax.experimental.pallas import tpu as pltpu


def _round_up(x, m):
    return (x + m - 1) // m * m


def _qnet_fused_kernel(x_ref, w_ref, b_ref, out_ref, *, d_in_pad, h_pad):
    """Fused twin-Q MLP: 3 block-diagonal layers, single (B, 2) output.

    x_ref : (B, d_in_pad) bf16   concatenated [state | action | 0-pad]
    w_ref : (d_in_pad + 2*h_pad, h_pad) bf16  packed [W1 | W2 | W3]
    b_ref : (3, h_pad) f32       packed [b1 | b2 | b3]
    out   : (B, 2) f32           q1 in lane 0, q2 in lane 1
    """
    # Static, 16-row-aligned slices of the packed bf16 weight slab.
    w1 = w_ref[0:d_in_pad, :]                          # (d_in_pad, h_pad)
    w2 = w_ref[d_in_pad:d_in_pad + h_pad, :]           # (h_pad, h_pad) block-diag
    w3 = w_ref[d_in_pad + h_pad:d_in_pad + 2 * h_pad, :]  # (h_pad, h_pad) cols 0,1
    b1 = b_ref[0:1, :]
    b2 = b_ref[1:2, :]
    b3 = b_ref[2:3, :]

    x = x_ref[...]                                              # bf16
    # Layer 1 (bf16 operands, f32 accumulate; bias/ReLU in f32).
    h = jnp.dot(x, w1, preferred_element_type=jnp.float32) + b1
    h = jnp.maximum(h, 0.0).astype(jnp.bfloat16)
    # Layer 2: block-diagonal -> both heads in one matmul.
    h = jnp.dot(h, w2, preferred_element_type=jnp.float32) + b2
    h = jnp.maximum(h, 0.0).astype(jnp.bfloat16)
    # Layer 3: padded W3 keeps operands full-width; lanes >= 2 are exact zeros.
    q = jnp.dot(h, w3, preferred_element_type=jnp.float32) + b3  # (B, h_pad) f32
    out_ref[...] = q[:, 0:2].astype(out_ref.dtype)               # q1|q2 lanes


def init_qnetwork_params(key, obs_dim, action_dim, hidden_dim):
    """Deterministic PyTorch-style init: U(-1/sqrt(fan_in), 1/sqrt(fan_in)).

    Returns 6 (w, b) pairs: q1 layers 0..2 then q2 layers 0..2, with
    w stored as (in_features, out_features) and b as (1, out_features).
    """
    d_in = obs_dim + action_dim
    layer_dims = [(d_in, hidden_dim), (hidden_dim, hidden_dim), (hidden_dim, 1)]
    params = []
    for _head in range(2):
        for fan_in, fan_out in layer_dims:
            key, kw, kb = jax.random.split(key, 3)
            bound = 1.0 / float(fan_in) ** 0.5
            w = jax.random.uniform(kw, (fan_in, fan_out), jnp.float32,
                                   minval=-bound, maxval=bound)
            b = jax.random.uniform(kb, (1, fan_out), jnp.float32,
                                   minval=-bound, maxval=bound)
            params.append((w, b))
    return params


def pack_qnetwork_params(params, *, lane=128, sub=16):
    """Pack the 12 per-head tensors into one bf16 weight slab + one f32 bias slab.

    Fused width h_pad = round_up(2*hidden, 128)  (lane-dense activations).
    Input depth d_in_pad = round_up(obs+action, 16)  (bf16 sublane-aligned).
    """
    (w1a, b1a), (w2a, b2a), (w3a, b3a), (w1b, b1b), (w2b, b2b), (w3b, b3b) = params
    d_in, hidden = w1a.shape
    h2 = 2 * hidden
    h_pad = _round_up(h2, lane)
    d_in_pad = _round_up(d_in, sub)

    # Layer 1: heads concatenated along out_features, zero-padded to h_pad.
    w1f = jnp.zeros((d_in_pad, h_pad), jnp.float32)
    w1f = w1f.at[:d_in, :hidden].set(w1a).at[:d_in, hidden:h2].set(w1b)
    b1f = jnp.zeros((1, h_pad), jnp.float32)
    b1f = b1f.at[:, :hidden].set(b1a).at[:, hidden:h2].set(b1b)

    # Layer 2: block-diagonal; padded rows/cols stay zero.
    w2f = jnp.zeros((h_pad, h_pad), jnp.float32)
    w2f = w2f.at[:hidden, :hidden].set(w2a).at[hidden:h2, hidden:h2].set(w2b)
    b2f = jnp.zeros((1, h_pad), jnp.float32)
    b2f = b2f.at[:, :hidden].set(b2a).at[:, hidden:h2].set(b2b)

    # Layer 3: q1 -> column 0, q2 -> column 1, padded to h_pad columns.
    w3f = jnp.zeros((h_pad, h_pad), jnp.float32)
    w3f = w3f.at[:hidden, 0:1].set(w3a).at[hidden:h2, 1:2].set(w3b)
    b3f = jnp.zeros((1, h_pad), jnp.float32)
    b3f = b3f.at[0, 0].set(b3a[0, 0]).at[0, 1].set(b3b[0, 0])

    w_slab = jnp.concatenate([w1f, w2f, w3f], axis=0).astype(jnp.bfloat16)
    b_slab = jnp.concatenate([b1f, b2f, b3f], axis=0).astype(jnp.float32)
    return w_slab, b_slab


def qnetwork_forward(state, action, w_slab, b_slab, *, batch_tile=512):
    """Pallas-backed equivalent of QNetwork.forward(state, action) -> (q1, q2)."""
    if action.ndim == 3:
        action = jnp.squeeze(action, axis=1)           # (B, 1, A) -> (B, A)

    h_pad = w_slab.shape[1]
    d_in_pad = w_slab.shape[0] - 2 * h_pad

    batch, obs_dim = state.shape
    action_dim = action.shape[-1]
    d_in = obs_dim + action_dim

    # Fold torch.cat([state, action], -1) into one lane-padded bf16 operand.
    x = jnp.concatenate([state, action], axis=-1)
    if d_in_pad > d_in:
        x = jnp.pad(x, ((0, 0), (0, d_in_pad - d_in)))
    x = x.astype(jnp.bfloat16)

    kernel = functools.partial(_qnet_fused_kernel,
                               d_in_pad=d_in_pad, h_pad=h_pad)

    if batch <= batch_tile:
        # Small/moderate batches: one step, everything resident in VMEM.
        vmem = pl.BlockSpec(memory_space=pltpu.MemorySpace.VMEM)
        out = pl.pallas_call(
            kernel,
            out_shape=jax.ShapeDtypeStruct((batch, 2), jnp.float32),
            in_specs=[vmem, vmem, vmem],
            out_specs=vmem,
        )(x, w_slab, b_slab)
    else:
        # Large batches: 512-row tiles (pipelined DMA, ~85% of HBM roofline);
        # >=2 "parallel" steps so the batch axis shards across v7x's 2 TCs.
        pad = (-batch) % batch_tile
        if pad:
            x = jnp.pad(x, ((0, pad), (0, 0)))
        padded = batch + pad
        out = pl.pallas_call(
            kernel,
            out_shape=jax.ShapeDtypeStruct((padded, 2), jnp.float32),
            grid=(padded // batch_tile,),
            in_specs=[
                pl.BlockSpec((batch_tile, d_in_pad), lambda i: (i, 0)),
                pl.BlockSpec(w_slab.shape, lambda i: (0, 0)),
                pl.BlockSpec(b_slab.shape, lambda i: (0, 0)),
            ],
            out_specs=pl.BlockSpec((batch_tile, 2), lambda i: (i, 0)),
            compiler_params=pltpu.CompilerParams(
                dimension_semantics=("parallel",)),
        )(x, w_slab, b_slab)
        out = out[:batch]

    return out[:, 0:1], out[:, 1:2]


def qnetwork_forward_ref(state, action, params, *, operand_dtype=jnp.float32):
    """Pure-JAX reference on the original (unfused) parameters.

    operand_dtype=jnp.bfloat16 mirrors the kernel's MXU operand precision
    (f32 accumulation, f32 bias/ReLU); float32 is the exact module math.
    """
    a = jnp.squeeze(action, axis=1)
    x = jnp.concatenate([state, a], axis=-1)

    def mlp(ps):
        h = x
        for i, (w, b) in enumerate(ps):
            h = jnp.dot(h.astype(operand_dtype), w.astype(operand_dtype),
                        preferred_element_type=jnp.float32) + b
            if i < 2:
                h = jnp.maximum(h, 0.0)
        return h

    return mlp(params[:3]), mlp(params[3:])


if __name__ == "__main__":
    obs_dim, action_dim, hidden_dim = 24, 8, 32
    batch = 4

    key = jax.random.PRNGKey(0)
    key, k_state, k_action, k_params = jax.random.split(key, 4)

    state = jax.random.normal(k_state, (batch, obs_dim), jnp.float32)
    # action carries a singleton dim-1 (matches `action.squeeze(1)` in forward)
    action = jax.random.normal(k_action, (batch, 1, action_dim), jnp.float32)

    params = init_qnetwork_params(k_params, obs_dim, action_dim, hidden_dim)
    w_slab, b_slab = pack_qnetwork_params(params)

    # --- tiny inference batch: single-step, fully VMEM-resident path ---
    q1, q2 = qnetwork_forward(state, action, w_slab, b_slab)
    jax.block_until_ready((q1, q2))
    assert q1.shape == (batch, 1) and q2.shape == (batch, 1)
    # Tight check vs a bf16-operand reference (matches kernel precision) ...
    q1_bf, q2_bf = qnetwork_forward_ref(state, action, params,
                                        operand_dtype=jnp.bfloat16)
    assert jnp.allclose(q1, q1_bf, atol=2e-3, rtol=2e-3)
    assert jnp.allclose(q2, q2_bf, atol=2e-3, rtol=2e-3)
    # ... and a loose check vs the exact f32 module math.
    q1_f, q2_f = qnetwork_forward_ref(state, action, params)
    assert jnp.allclose(q1, q1_f, atol=5e-2, rtol=5e-2)
    assert jnp.allclose(q2, q2_f, atol=5e-2, rtol=5e-2)

    # --- training-size batch: 512-row tiled, pipelined, 2 parallel steps ---
    big_batch = 1000                      # non-multiple: exercises pad + slice
    key, k_sb, k_ab = jax.random.split(key, 3)
    state_b = jax.random.normal(k_sb, (big_batch, obs_dim), jnp.float32)
    action_b = jax.random.normal(k_ab, (big_batch, 1, action_dim), jnp.float32)
    q1_b, q2_b = qnetwork_forward(state_b, action_b, w_slab, b_slab)
    jax.block_until_ready((q1_b, q2_b))
    assert q1_b.shape == (big_batch, 1) and q2_b.shape == (big_batch, 1)
    q1_bbf, q2_bbf = qnetwork_forward_ref(state_b, action_b, params,
                                          operand_dtype=jnp.bfloat16)
    assert jnp.allclose(q1_b, q1_bbf, atol=2e-3, rtol=2e-3)
    assert jnp.allclose(q2_b, q2_bbf, atol=2e-3, rtol=2e-3)
    q1_bf32, q2_bf32 = qnetwork_forward_ref(state_b, action_b, params)
    assert jnp.allclose(q1_b, q1_bf32, atol=5e-2, rtol=5e-2)
    assert jnp.allclose(q2_b, q2_bf32, atol=5e-2, rtol=5e-2)

    print("KERNEL_OK")
</pallas_src>

<mosaic_0001>
module attributes {stable_mosaic.version = 11 : i64} {
  func.func @_qnet_fused_kernel(%arg0: memref<4x32xbf16, #tpu.memory_space<vmem>>, %arg1: memref<288x128xbf16, #tpu.memory_space<vmem>>, %arg2: memref<3x128xf32, #tpu.memory_space<vmem>>, %arg3: memref<4x2xf32, #tpu.memory_space<vmem>>) attributes {dimension_semantics = [], scalar_prefetch = 0 : i64, scratch_operands = 0 : i64, tpu.core_type = #tpu.core_type<tc>} {
    %c0 = arith.constant 0 : index
    %c0_0 = arith.constant 0 : index
    %0 = vector.load %arg1[%c0, %c0_0] : memref<288x128xbf16, #tpu.memory_space<vmem>>, vector<32x128xbf16>
    %c32 = arith.constant 32 : index
    %c0_1 = arith.constant 0 : index
    %1 = vector.load %arg1[%c32, %c0_1] : memref<288x128xbf16, #tpu.memory_space<vmem>>, vector<128x128xbf16>
    %c160 = arith.constant 160 : index
    %c0_2 = arith.constant 0 : index
    %2 = vector.load %arg1[%c160, %c0_2] : memref<288x128xbf16, #tpu.memory_space<vmem>>, vector<128x128xbf16>
    %c0_3 = arith.constant 0 : index
    %c0_4 = arith.constant 0 : index
    %3 = vector.load %arg2[%c0_3, %c0_4] : memref<3x128xf32, #tpu.memory_space<vmem>>, vector<1x128xf32>
    %c1 = arith.constant 1 : index
    %c0_5 = arith.constant 0 : index
    %4 = vector.load %arg2[%c1, %c0_5] : memref<3x128xf32, #tpu.memory_space<vmem>>, vector<1x128xf32>
    %c2 = arith.constant 2 : index
    %c0_6 = arith.constant 0 : index
    %5 = vector.load %arg2[%c2, %c0_6] : memref<3x128xf32, #tpu.memory_space<vmem>>, vector<1x128xf32>
    %c0_7 = arith.constant 0 : index
    %c0_8 = arith.constant 0 : index
    %6 = vector.load %arg0[%c0_7, %c0_8] : memref<4x32xbf16, #tpu.memory_space<vmem>>, vector<4x32xbf16>
    %cst = arith.constant dense<0.000000e+00> : vector<4x128xf32>
    %7 = tpu.matmul %6, %0, %cst {dimension_numbers = #tpu.dot_dimension_numbers<[1], [0], [0], [1], [0, 0, 1, 1], [], []>} : vector<4x32xbf16>, vector<32x128xbf16>, vector<4x128xf32> -> vector<4x128xf32>
    %8 = vector.broadcast %3 : vector<1x128xf32> to vector<4x128xf32>
    %9 = arith.addf %7, %8 : vector<4x128xf32>
    %cst_9 = arith.constant 0.000000e+00 : f32
    %10 = vector.broadcast %cst_9 : f32 to vector<4x128xf32>
    %11 = arith.maximumf %9, %10 : vector<4x128xf32>
    %12 = arith.truncf %11 : vector<4x128xf32> to vector<4x128xbf16>
    %cst_10 = arith.constant dense<0.000000e+00> : vector<4x128xf32>
    %13 = tpu.matmul %12, %1, %cst_10 {dimension_numbers = #tpu.dot_dimension_numbers<[1], [0], [0], [1], [0, 0, 1, 1], [], []>} : vector<4x128xbf16>, vector<128x128xbf16>, vector<4x128xf32> -> vector<4x128xf32>
    %14 = vector.broadcast %4 : vector<1x128xf32> to vector<4x128xf32>
    %15 = arith.addf %13, %14 : vector<4x128xf32>
    %cst_11 = arith.constant 0.000000e+00 : f32
    %16 = vector.broadcast %cst_11 : f32 to vector<4x128xf32>
    %17 = arith.maximumf %15, %16 : vector<4x128xf32>
    %18 = arith.truncf %17 : vector<4x128xf32> to vector<4x128xbf16>
    %cst_12 = arith.constant dense<0.000000e+00> : vector<4x128xf32>
    %19 = tpu.matmul %18, %2, %cst_12 {dimension_numbers = #tpu.dot_dimension_numbers<[1], [0], [0], [1], [0, 0, 1, 1], [], []>} : vector<4x128xbf16>, vector<128x128xbf16>, vector<4x128xf32> -> vector<4x128xf32>
    %20 = vector.broadcast %5 : vector<1x128xf32> to vector<4x128xf32>
    %21 = arith.addf %19, %20 : vector<4x128xf32>
    %22 = vector.extract_strided_slice %21 {offsets = [0, 0], sizes = [4, 2], strides = [1, 1]} : vector<4x128xf32> to vector<4x2xf32>
    %c0_13 = arith.constant 0 : index
    %c0_14 = arith.constant 0 : index
    %23 = vector.load %arg3[%c0_13, %c0_14] : memref<4x2xf32, #tpu.memory_space<vmem>>, vector<4x2xf32>
    tpu.vector_store %arg3[%c0_13, %c0_14], %22 {strides = array<i32>} : memref<4x2xf32, #tpu.memory_space<vmem>>, vector<4x2xf32>,
    return
  }
}

</mosaic_0001>

<llo_original>
// kernel: tpu_custom_call.1
$region0: #{tpu_custom_call.1}
  #allocation0 [shape = 'u32[]', space=smem, size = 0x4, offset = 0x4, fixed_abs, tag = 'smem constant byte address 0x4 - core index']
  #allocation1 [shape = 'u32[144,128]{1,0:T(1,128)}', space=vmem, size = 0x12000, scoped, tag = 'internal scratch']
  %s0 = inlined_call_operand.hbm [shape: bf16[4,32], index: 0, kind: input, shape index: {}]
  %s1 = inlined_call_operand.hbm [shape: bf16[288,128], index: 1, kind: input, shape index: {}]
  %s2 = inlined_call_operand.hbm [shape: f32[3,128], index: 2, kind: input, shape index: {}]
  %s3 = inlined_call_operand.vmem [shape: f32[4,2], index: 3, kind: output, shape index: {}]
  %s4 = sld [smem:[#allocation0]]
  $region34: #{tpu_custom_call.1} parent=0
    _
  %s6 = ssub.s32 1, %s4
  %s7 = scalar_select 0, %s6, %s4
  $region1: #{tpu_custom_call.1} parent=0
    #allocation2 [shape = 'u8[1024]{0}', space=vmem, size = 0x400, scoped, tag = 'input window, operand 0, single buffered']
    #allocation3 [shape = 's32[1]{0}', space=sflag, size = 0x4, scoped, tag = 'scoped memory for tpu_custom_call.1']
    #allocation4 [shape = 'u8[73728]{0}', space=vmem, size = 0x12000, scoped, tag = 'input window, operand 1, single buffered']
    #allocation5 [shape = 's32[1]{0}', space=sflag, size = 0x4, scoped, tag = 'scoped memory for tpu_custom_call.1']
    #allocation6 [shape = 'u8[2048]{0}', space=vmem, size = 0x800, scoped, tag = 'input window, operand 2, single buffered']
    %8 = vsyncpa [#allocation3], 0
    %9 = vsyncpa [#allocation5], 0
    // Predicated region
    $region2: #{tpu_custom_call.1} parent=1 // pred_check
      _
    $region3: #{tpu_custom_call.1} parent=1 // pred_check_branch
      %11 = sbr.rel (0) target = $region5
    $region4: #{tpu_custom_call.1} parent=1 // pred_region
      %s13 = ssub.s32 32, 32
      %14 = vsyncadd [#allocation3], %s13
      %s16 = sshll.u32 [#allocation2], 4
      %s17 = int_to_ptr.vmem [resolvable:$true] %s16
      %19 = dma.hbm_to_vmem [thread:$0]  %s0, 32, %s17, [#allocation3]
    $region5: #{tpu_custom_call.1} parent=1 // pred_fallthru
      _
    // Predicated region
    $region6: #{tpu_custom_call.1} parent=1 // pred_check
      _
    $region7: #{tpu_custom_call.1} parent=1 // pred_check_branch
      %21 = sbr.rel (0) target = $region9
    $region8: #{tpu_custom_call.1} parent=1 // pred_region
      %s23 = ssub.s32 2304, 2304
      %24 = vsyncadd [#allocation5], %s23
      %s25 = sshll.u32 [#allocation4], 4
      %s26 = int_to_ptr.vmem [resolvable:$true] %s25
      %31 = dma.hbm_to_vmem [thread:$0]  %s1, 2304, %s26, [#allocation5], 64, 64, 4
    $region9: #{tpu_custom_call.1} parent=1 // pred_fallthru
      _
    // Predicated region
    $region10: #{tpu_custom_call.1} parent=1 // pred_check
      _
    $region11: #{tpu_custom_call.1} parent=1 // pred_check_branch
      %33 = sbr.rel (0) target = $region13
    $region12: #{tpu_custom_call.1} parent=1 // pred_region
      %s35 = ssub.s32 64, 64
      %36 = vsyncadd [#allocation5], %s35
      %s38 = sshll.u32 [#allocation6], 4
      %s39 = int_to_ptr.vmem [resolvable:$true] %s38
      %41 = dma.hbm_to_vmem [thread:$0]  %s2, 64, %s39, [#allocation5]
    $region13: #{tpu_custom_call.1} parent=1 // pred_fallthru
      _
    // Predicated region
    $region14: #{tpu_custom_call.1} parent=1 // pred_check
      _
    $region15: #{tpu_custom_call.1} parent=1 // pred_check_branch
      %43 = sbr.rel (0) target = $region17
    $region16: #{tpu_custom_call.1} parent=1 // pred_region
      %44 = dma.done [#allocation3], 32
    $region17: #{tpu_custom_call.1} parent=1 // pred_fallthru
      _
    // Predicated region
    $region18: #{tpu_custom_call.1} parent=1 // pred_check
      _
    $region19: #{tpu_custom_call.1} parent=1 // pred_check_branch
      %46 = sbr.rel (0) target = $region21
    $region20: #{tpu_custom_call.1} parent=1 // pred_region
      %47 = dma.done [#allocation5], 2304
    $region21: #{tpu_custom_call.1} parent=1 // pred_fallthru
      _
    // Predicated region
    $region22: #{tpu_custom_call.1} parent=1 // pred_check
      _
    $region23: #{tpu_custom_call.1} parent=1 // pred_check_branch
      %49 = sbr.rel (0) target = $region25
    $region24: #{tpu_custom_call.1} parent=1 // pred_region
      %50 = dma.done [#allocation5], 64
    $region25: #{tpu_custom_call.1} parent=1 // pred_fallthru
      _
    %v52 = vld [vmem:[#allocation4] sm:$0xf]
    %v53 = vld [vmem:[#allocation4 + $0x4] sm:$0xf]
    %v54 = vld [vmem:[#allocation4 + $0x8] sm:$0xf]
    %v55 = vld [vmem:[#allocation4 + $0xc] sm:$0xf]
    %v56 = vld [vmem:[#allocation4 + $0x10] sm:$0xf]
    %v57 = vld [vmem:[#allocation4 + $0x14] sm:$0xf]
    %v58 = vld [vmem:[#allocation4 + $0x18] sm:$0xf]
    %v59 = vld [vmem:[#allocation4 + $0x1c] sm:$0xf]
    %v60 = vld [vmem:[#allocation4 + $0x20] sm:$0xf]
    %v61 = vld [vmem:[#allocation4 + $0x24] sm:$0xf]
    %v62 = vld [vmem:[#allocation4 + $0x28] sm:$0xf]
    %v63 = vld [vmem:[#allocation4 + $0x2c] sm:$0xf]
    %v64 = vld [vmem:[#allocation4 + $0x30] sm:$0xf]
    %v65 = vld [vmem:[#allocation4 + $0x34] sm:$0xf]
    %v66 = vld [vmem:[#allocation4 + $0x38] sm:$0xf]
    %v67 = vld [vmem:[#allocation4 + $0x3c] sm:$0xf]
    %v68 = vld [vmem:[#allocation4 + $0x40] sm:$0xf]
    %v69 = vld [vmem:[#allocation4 + $0x44] sm:$0xf]
    %v70 = vld [vmem:[#allocation4 + $0x48] sm:$0xf]
    %v71 = vld [vmem:[#allocation4 + $0x4c] sm:$0xf]
    %v72 = vld [vmem:[#allocation4 + $0x50] sm:$0xf]
    %v73 = vld [vmem:[#allocation4 + $0x54] sm:$0xf]
    %v74 = vld [vmem:[#allocation4 + $0x58] sm:$0xf]
    %v75 = vld [vmem:[#allocation4 + $0x5c] sm:$0xf]
    %v76 = vld [vmem:[#allocation4 + $0x60] sm:$0xf]
    %v77 = vld [vmem:[#allocation4 + $0x64] sm:$0xf]
    %v78 = vld [vmem:[#allocation4 + $0x68] sm:$0xf]
    %v79 = vld [vmem:[#allocation4 + $0x6c] sm:$0xf]
    %v80 = vld [vmem:[#allocation4 + $0x70] sm:$0xf]
    %v81 = vld [vmem:[#allocation4 + $0x74] sm:$0xf]
    %v82 = vld [vmem:[#allocation4 + $0x78] sm:$0xf]
    %v83 = vld [vmem:[#allocation4 + $0x7c] sm:$0xf]
    %v84 = vld [vmem:[#allocation4 + $0x80] sm:$0xf]
    %v85 = vld [vmem:[#allocation4 + $0x84] sm:$0xf]
    %v86 = vld [vmem:[#allocation4 + $0x88] sm:$0xf]
    %v87 = vld [vmem:[#allocation4 + $0x8c] sm:$0xf]
    %v88 = vld [vmem:[#allocation6] sm:$0x1]
    %v89 = vld [vmem:[#allocation6 + $0x1] sm:$0x1]
    %v90 = vld [vmem:[#allocation6 + $0x2] sm:$0x1]
    %v91 = vld [vmem:[#allocation2] sm:$0x3]
    %v92 = vlaneseq
    %v93 = vshrl.u32 %v92, 7
    %v94 = vsub.s32 0, %v93
    %v95 = vrot.slane %v88, %v94
    %v100 = vunpack.c.l.b16 %v52
    %v101 = vunpack.c.l.b16 %v53
    %v102 = vunpack.c.l.b16 %v54
    %v103 = vunpack.c.l.b16 %v55
    %v104 = vpack.c.b16 %v101, %v100
    %v105 = vpack.c.b16 %v103, %v102
    %vm108 = vcmask 261120
    %v110 = vsel %vm108, %v91, 0
    %112 = vmatprep.subr.bf16.mxu0 0
    %113 = vmatpush1.bf16.msra.mxu0 0
    %114 = vmatprep.subr.bf16.mxu0 0
    %115 = vmatpush1.bf16.msra.mxu0 0
    %116 = vmatprep.subr.bf16.mxu0 0
    %117 = vmatpush1.bf16.msra.mxu0 0
    %118 = vmatprep.subr.bf16.mxu0 0
    %119 = vmatpush1.bf16.msra.mxu0 0
    %120 = vmatprep.subr.bf16.mxu0 0
    %121 = vmatpush1.bf16.msra.mxu0 0
    %122 = vmatprep.subr.bf16.mxu0 0
    %123 = vmatpush1.bf16.msra.mxu0 0
    %124 = vmatprep.subr.bf16.mxu0 0
    %125 = vmatpush1.bf16.msra.mxu0 %v105
    %126 = vmatprep.subr.bf16.mxu0 0
    %127 = vmatpush1.bf16.msra.mxu0 %v104
    %128 = vmatprep.subr.bf16.mxu0 0
    %129 = vmatpush2.bf16.msra.mxu0 0
    %130 = vmatprep.subr.bf16.mxu0 0
    %131 = vmatpush2.bf16.msra.mxu0 0
    %132 = vmatprep.subr.bf16.mxu0 0
    %133 = vmatpush2.bf16.msra.mxu0 0
    %134 = vmatprep.subr.bf16.mxu0 0
    %135 = vmatpush2.bf16.msra.mxu0 0
    %136 = vmatprep.subr.bf16.mxu0 0
    %137 = vmatpush2.bf16.msra.mxu0 0
    %138 = vmatprep.subr.bf16.mxu0 0
    %139 = vmatpush2.bf16.msra.mxu0 0
    %140 = vmatprep.subr.bf16.mxu0 0
    %141 = vmatpush2.bf16.msra.mxu0 0
    %142 = vmatprep.subr.bf16.mxu0 0
    %143 = vmatpush2.bf16.msra.mxu0 0
    %144 = vmatprep.mubr.bf16.mxu0 0
    %145 = vmatmul.mubr.bf16.gmra.mxu0 %v110
    %v146 = vpop.f32.mrf.mxu0
    %v147 = vadd.f32 %v95, %v146
    %v148 = vpop.f32.mrf.mxu0
    %v149 = vpop.f32.mrf.mxu0
    %v150 = vpop.f32.mrf.mxu0
    %151 = vdwg.mxu0
    %v152 = vmax.f32 %v147, 0.0
    %v153 = vpack.c.bf16 %v152, %v152
    %v154 = vlaneseq
    %v155 = vshrl.u32 %v154, 7
    %v156 = vsub.s32 0, %v155
    %v157 = vrot.slane %v89, %v156
    %v174 = vunpack.c.l.b16 %v56
    %v175 = vunpack.c.l.b16 %v57
    %v176 = vunpack.c.l.b16 %v58
    %v177 = vunpack.c.l.b16 %v59
    %v178 = vunpack.c.l.b16 %v60
    %v179 = vunpack.c.l.b16 %v61
    %v180 = vunpack.c.l.b16 %v62
    %v181 = vunpack.c.l.b16 %v63
    %v182 = vunpack.c.l.b16 %v64
    %v183 = vunpack.c.l.b16 %v65
    %v184 = vunpack.c.l.b16 %v66
    %v185 = vunpack.c.l.b16 %v67
    %v186 = vunpack.c.l.b16 %v68
    %v187 = vunpack.c.l.b16 %v69
    %v188 = vunpack.c.l.b16 %v70
    %v189 = vunpack.c.l.b16 %v71
    %v190 = vpack.c.b16 %v175, %v174
    %v191 = vpack.c.b16 %v177, %v176
    %v192 = vpack.c.b16 %v179, %v178
    %v193 = vpack.c.b16 %v181, %v180
    %v194 = vpack.c.b16 %v183, %v182
    %v195 = vpack.c.b16 %v185, %v184
    %v196 = vpack.c.b16 %v187, %v186
    %v197 = vpack.c.b16 %v189, %v188
    %206 = vmatprep.subr.bf16.mxu0 0
    %207 = vmatpush1.bf16.msra.mxu0 %v197
    %208 = vmatprep.subr.bf16.mxu0 0
    %209 = vmatpush1.bf16.msra.mxu0 %v196
    %210 = vmatprep.subr.bf16.mxu0 0
    %211 = vmatpush1.bf16.msra.mxu0 %v195
    %212 = vmatprep.subr.bf16.mxu0 0
    %213 = vmatpush1.bf16.msra.mxu0 %v194
    %214 = vmatprep.subr.bf16.mxu0 0
    %215 = vmatpush1.bf16.msra.mxu0 %v193
    %216 = vmatprep.subr.bf16.mxu0 0
    %217 = vmatpush1.bf16.msra.mxu0 %v192
    %218 = vmatprep.subr.bf16.mxu0 0
    %219 = vmatpush1.bf16.msra.mxu0 %v191
    %220 = vmatprep.subr.bf16.mxu0 0
    %221 = vmatpush1.bf16.msra.mxu0 %v190
    %222 = vmatprep.subr.bf16.mxu0 0
    %223 = vmatpush2.bf16.msra.mxu0 0
    %224 = vmatprep.subr.bf16.mxu0 0
    %225 = vmatpush2.bf16.msra.mxu0 0
    %226 = vmatprep.subr.bf16.mxu0 0
    %227 = vmatpush2.bf16.msra.mxu0 0
    %228 = vmatprep.subr.bf16.mxu0 0
    %229 = vmatpush2.bf16.msra.mxu0 0
    %230 = vmatprep.subr.bf16.mxu0 0
    %231 = vmatpush2.bf16.msra.mxu0 0
    %232 = vmatprep.subr.bf16.mxu0 0
    %233 = vmatpush2.bf16.msra.mxu0 0
    %234 = vmatprep.subr.bf16.mxu0 0
    %235 = vmatpush2.bf16.msra.mxu0 0
    %236 = vmatprep.subr.bf16.mxu0 0
    %237 = vmatpush2.bf16.msra.mxu0 0
    %238 = vmatprep.mubr.bf16.mxu0 0
    %239 = vmatmul.mubr.bf16.gmra.mxu0 %v153
    %v240 = vpop.f32.mrf.mxu0
    %v241 = vadd.f32 %v157, %v240
    %v242 = vpop.f32.mrf.mxu0
    %v243 = vpop.f32.mrf.mxu0
    %v244 = vpop.f32.mrf.mxu0
    %245 = vdwg.mxu0
    %v246 = vmax.f32 %v241, 0.0
    %v247 = vpack.c.bf16 %v246, %v246
    %v248 = vlaneseq
    %v249 = vshrl.u32 %v248, 7
    %v250 = vsub.s32 0, %v249
    %v251 = vrot.slane %v90, %v250
    %v268 = vunpack.c.l.b16 %v72
    %v269 = vunpack.c.l.b16 %v73
    %v270 = vunpack.c.l.b16 %v74
    %v271 = vunpack.c.l.b16 %v75
    %v272 = vunpack.c.l.b16 %v76
    %v273 = vunpack.c.l.b16 %v77
    %v274 = vunpack.c.l.b16 %v78
    %v275 = vunpack.c.l.b16 %v79
    %v276 = vunpack.c.l.b16 %v80
    %v277 = vunpack.c.l.b16 %v81
    %v278 = vunpack.c.l.b16 %v82
    %v279 = vunpack.c.l.b16 %v83
    %v280 = vunpack.c.l.b16 %v84
    %v281 = vunpack.c.l.b16 %v85
    %v282 = vunpack.c.l.b16 %v86
    %v283 = vunpack.c.l.b16 %v87
    %v284 = vpack.c.b16 %v269, %v268
    %v285 = vpack.c.b16 %v271, %v270
    %v286 = vpack.c.b16 %v273, %v272
    %v287 = vpack.c.b16 %v275, %v274
    %v288 = vpack.c.b16 %v277, %v276
    %v289 = vpack.c.b16 %v279, %v278
    %v290 = vpack.c.b16 %v281, %v280
    %v291 = vpack.c.b16 %v283, %v282
    %300 = vmatprep.subr.bf16.mxu0 0
    %301 = vmatpush1.bf16.msra.mxu0 %v291
    %302 = vmatprep.subr.bf16.mxu0 0
    %303 = vmatpush1.bf16.msra.mxu0 %v290
    %304 = vmatprep.subr.bf16.mxu0 0
    %305 = vmatpush1.bf16.msra.mxu0 %v289
    %306 = vmatprep.subr.bf16.mxu0 0
    %307 = vmatpush1.bf16.msra.mxu0 %v288
    %308 = vmatprep.subr.bf16.mxu0 0
    %309 = vmatpush1.bf16.msra.mxu0 %v287
    %310 = vmatprep.subr.bf16.mxu0 0
    %311 = vmatpush1.bf16.msra.mxu0 %v286
    %312 = vmatprep.subr.bf16.mxu0 0
    %313 = vmatpush1.bf16.msra.mxu0 %v285
    %314 = vmatprep.subr.bf16.mxu0 0
    %315 = vmatpush1.bf16.msra.mxu0 %v284
    %316 = vmatprep.subr.bf16.mxu0 0
    %317 = vmatpush2.bf16.msra.mxu0 0
    %318 = vmatprep.subr.bf16.mxu0 0
    %319 = vmatpush2.bf16.msra.mxu0 0
    %320 = vmatprep.subr.bf16.mxu0 0
    %321 = vmatpush2.bf16.msra.mxu0 0
    %322 = vmatprep.subr.bf16.mxu0 0
    %323 = vmatpush2.bf16.msra.mxu0 0
    %324 = vmatprep.subr.bf16.mxu0 0
    %325 = vmatpush2.bf16.msra.mxu0 0
    %326 = vmatprep.subr.bf16.mxu0 0
    %327 = vmatpush2.bf16.msra.mxu0 0
    %328 = vmatprep.subr.bf16.mxu0 0
    %329 = vmatpush2.bf16.msra.mxu0 0
    %330 = vmatprep.subr.bf16.mxu0 0
    %331 = vmatpush2.bf16.msra.mxu0 0
    %332 = vmatprep.mubr.bf16.mxu0 0
    %333 = vmatmul.mubr.bf16.gmra.mxu0 %v247
    %v334 = vpop.f32.mrf.mxu0
    %v335 = vadd.f32 %v251, %v334
    %v336 = vpop.f32.mrf.mxu0
    %v337 = vpop.f32.mrf.mxu0
    %v338 = vpop.f32.mrf.mxu0
    %339 = vdwg.mxu0
    %vm340 = vcmask 11264
    %341 = vst.msk [vmem:[%s3] sm:$0xf] %vm340, %v335
    // Predicated region
    $region26: #{tpu_custom_call.1} parent=1 // pred_check
      _
    $region27: #{tpu_custom_call.1} parent=1 // pred_check_branch
      %343 = sbr.rel (0) target = $region29
    $region28: #{tpu_custom_call.1} parent=1 // pred_region
      _
    $region29: #{tpu_custom_call.1} parent=1 // pred_fallthru
      _
    // Predicated region
    $region30: #{tpu_custom_call.1} parent=1 // pred_check
      _
    $region31: #{tpu_custom_call.1} parent=1 // pred_check_branch
      %345 = sbr.rel (0) target = $region33
    $region32: #{tpu_custom_call.1} parent=1 // pred_region
      _
    $region33: #{tpu_custom_call.1} parent=1 // pred_fallthru
      _
    %346 = vsyncpa [#allocation3], 1
    %347 = vsyncpa [#allocation5], 1

</llo_original>
